<compile_context>
chip_gen: v7x
topology: tpu7x:2x2x1
jax: 0.10.0
libtpu: 0.0.40
codegen_flags: <defaults>
</compile_context>

<pallas_src>
import jax
import jax.numpy as jnp
from jax.experimental import pallas as pl
from jax.experimental.pallas import tpu as pltpu

LANE = 128  # TPU lane width: last dims padded to multiples of 128 for dense stores.


def _round_up(x, m):
    return (x + m - 1) // m * m


def dense_qnetwork_kernel(x_ref, w1_ref, b1_ref, w2_ref, b2_ref, w3_ref, b3_ref,
                          out_ref):
    """Fused MLP: relu(x@W1+b1) -> relu(@W2+b2) -> @W3+b3.

    Matmuls run on the MXU with bf16 operands and f32 accumulation; bias adds
    and ReLUs stay in f32 on the VPU.
    """
    x = x_ref[...]                                                    # [TB, S] bf16

    h1 = jnp.dot(x, w1_ref[...], preferred_element_type=jnp.float32) + b1_ref[...]
    h1 = jnp.maximum(h1, 0.0)                                         # [TB, F1] f32

    h2 = jnp.dot(h1.astype(w2_ref.dtype), w2_ref[...],
                 preferred_element_type=jnp.float32) + b2_ref[...]
    h2 = jnp.maximum(h2, 0.0)                                         # [TB, F2] f32

    logits = jnp.dot(h2.astype(w3_ref.dtype), w3_ref[...],
                     preferred_element_type=jnp.float32) + b3_ref[...]
    out_ref[...] = logits.astype(out_ref.dtype)                       # [TB, A_pad] f32


def dense_qnetwork_forward(x, params, *, tile_b=128):
    """Runs the fused DQN forward; returns f32 Q-values of shape [batch, action_size]."""
    w1, b1, w2, b2, w3, b3 = params
    batch, state_size = x.shape
    fc1_units = w1.shape[1]
    fc2_units = w2.shape[1]
    action_size = w3.shape[1]

    # Lane-dense output: zero-pad the last layer to a multiple of 128 columns.
    a_pad = max(LANE, _round_up(action_size, LANE))
    w3p = jnp.pad(w3, ((0, 0), (0, a_pad - action_size)))
    b3p = jnp.pad(b3, ((0, 0), (0, a_pad - action_size)))

    # Pick a batch tile and pad the batch so the grid divides evenly.
    tile_b = min(tile_b, _round_up(batch, 8))
    b_pad = _round_up(batch, tile_b)
    if b_pad != batch:
        x = jnp.pad(x, ((0, b_pad - batch), (0, 0)))
    x = x.astype(w1.dtype)  # bf16 activations into the MXU

    grid = (b_pad // tile_b,)

    flops = 2 * b_pad * (state_size * fc1_units
                         + fc1_units * fc2_units
                         + fc2_units * a_pad)
    weight_bytes = sum(int(p.size) * p.dtype.itemsize
                       for p in (w1, b1, w2, b2, w3p, b3p))
    bytes_accessed = (int(x.size) * x.dtype.itemsize
                      + weight_bytes
                      + b_pad * a_pad * 4)

    out = pl.pallas_call(
        dense_qnetwork_kernel,
        out_shape=jax.ShapeDtypeStruct((b_pad, a_pad), jnp.float32),
        grid=grid,
        in_specs=[
            # Activations: one batch tile per grid step (double-buffered).
            pl.BlockSpec((tile_b, state_size), lambda i: (i, 0)),
            # Weights / biases: constant index_map -> DMA'd once, VMEM-resident.
            pl.BlockSpec((state_size, fc1_units), lambda i: (0, 0)),
            pl.BlockSpec((1, fc1_units), lambda i: (0, 0)),
            pl.BlockSpec((fc1_units, fc2_units), lambda i: (0, 0)),
            pl.BlockSpec((1, fc2_units), lambda i: (0, 0)),
            pl.BlockSpec((fc2_units, a_pad), lambda i: (0, 0)),
            pl.BlockSpec((1, a_pad), lambda i: (0, 0)),
        ],
        out_specs=pl.BlockSpec((tile_b, a_pad), lambda i: (i, 0)),
        compiler_params=pltpu.CompilerParams(
            dimension_semantics=("parallel",)),
        cost_estimate=pl.CostEstimate(
            flops=flops, transcendentals=0, bytes_accessed=bytes_accessed),
    )(x, w1, b1, w2, b2, w3p, b3p)

    # Slice away batch padding and the zero-padded action lanes (must happen
    # before any argmax over actions).
    return out[:batch, :action_size]


def init_params(key, state_size, action_size, fc1_units=256, fc2_units=128,
                weight_dtype=jnp.bfloat16):
    """Deterministic init mimicking nn.Linear's U(-1/sqrt(fan_in), 1/sqrt(fan_in)).

    Weights are stored [in, out] in bf16 (MXU-native on v6e/v7x); biases stay f32.
    """
    def linear_init(k, fan_in, fan_out):
        kw, kb = jax.random.split(k)
        bound = 1.0 / float(jnp.sqrt(jnp.float32(fan_in)))
        w = jax.random.uniform(kw, (fan_in, fan_out), jnp.float32, -bound, bound)
        b = jax.random.uniform(kb, (1, fan_out), jnp.float32, -bound, bound)
        return w.astype(weight_dtype), b

    k1, k2, k3 = jax.random.split(key, 3)
    w1, b1 = linear_init(k1, state_size, fc1_units)
    w2, b2 = linear_init(k2, fc1_units, fc2_units)
    w3, b3 = linear_init(k3, fc2_units, action_size)
    return (w1, b1, w2, b2, w3, b3)


def reference_forward(x, params):
    """Pure-JAX reference performing the same bf16-matmul / f32-accumulate math."""
    w1, b1, w2, b2, w3, b3 = params
    h1 = jnp.maximum(
        jnp.dot(x.astype(w1.dtype), w1, preferred_element_type=jnp.float32) + b1, 0.0)
    h2 = jnp.maximum(
        jnp.dot(h1.astype(w2.dtype), w2, preferred_element_type=jnp.float32) + b2, 0.0)
    return jnp.dot(h2.astype(w3.dtype), w3, preferred_element_type=jnp.float32) + b3


if __name__ == "__main__":
    key = jax.random.PRNGKey(0)
    k_params, k_state = jax.random.split(key)

    batch = 256          # batch many env states per call (perf feedback)
    state_size = 8
    action_size = 4
    fc1_units = 256
    fc2_units = 128

    params = init_params(k_params, state_size, action_size, fc1_units, fc2_units)
    x = jax.random.normal(k_state, (batch, state_size), dtype=jnp.float32)

    out = dense_qnetwork_forward(x, params)
    out = jax.block_until_ready(out)

    ref = reference_forward(x, params)
    assert out.shape == (batch, action_size), out.shape
    max_err = float(jnp.max(jnp.abs(out - ref)))
    assert jnp.allclose(out, ref, atol=1e-2, rtol=1e-2), f"mismatch vs reference (max err {max_err})"

    print("KERNEL_OK")
</pallas_src>

<mosaic_0001>
module attributes {stable_mosaic.version = 11 : i64} {
  func.func @dense_qnetwork_kernel(%arg0: i32, %arg1: memref<128x8xbf16, #tpu.memory_space<vmem>>, %arg2: memref<8x256xbf16, #tpu.memory_space<vmem>>, %arg3: memref<1x256xf32, #tpu.memory_space<vmem>>, %arg4: memref<256x128xbf16, #tpu.memory_space<vmem>>, %arg5: memref<1x128xf32, #tpu.memory_space<vmem>>, %arg6: memref<128x128xbf16, #tpu.memory_space<vmem>>, %arg7: memref<1x128xf32, #tpu.memory_space<vmem>>, %arg8: memref<128x128xf32, #tpu.memory_space<vmem>>) attributes {dimension_semantics = [#tpu.dimension_semantics<parallel>], iteration_bounds = array<i64: 2>, scalar_prefetch = 0 : i64, scratch_operands = 0 : i64, tpu.core_type = #tpu.core_type<tc>, window_params = [{transform_indices = @transform_0, window_bounds = array<i64: 128, 8>}, {pipeline_mode = #tpu.pipeline_mode<synchronous>, transform_indices = @transform_1, window_bounds = array<i64: 8, 256>}, {pipeline_mode = #tpu.pipeline_mode<synchronous>, transform_indices = @transform_2, window_bounds = array<i64: 1, 256>}, {pipeline_mode = #tpu.pipeline_mode<synchronous>, transform_indices = @transform_3, window_bounds = array<i64: 256, 128>}, {pipeline_mode = #tpu.pipeline_mode<synchronous>, transform_indices = @transform_4, window_bounds = array<i64: 1, 128>}, {pipeline_mode = #tpu.pipeline_mode<synchronous>, transform_indices = @transform_5, window_bounds = array<i64: 128, 128>}, {pipeline_mode = #tpu.pipeline_mode<synchronous>, transform_indices = @transform_6, window_bounds = array<i64: 1, 128>}, {transform_indices = @transform_7, window_bounds = array<i64: 128, 128>}]} {
    %c0 = arith.constant 0 : index
    %c0_0 = arith.constant 0 : index
    %0 = vector.load %arg1[%c0, %c0_0] : memref<128x8xbf16, #tpu.memory_space<vmem>>, vector<128x8xbf16>
    %c0_1 = arith.constant 0 : index
    %c0_2 = arith.constant 0 : index
    %1 = vector.load %arg2[%c0_1, %c0_2] : memref<8x256xbf16, #tpu.memory_space<vmem>>, vector<8x256xbf16>
    %cst = arith.constant dense<0.000000e+00> : vector<128x256xf32>
    %2 = tpu.matmul %0, %1, %cst {dimension_numbers = #tpu.dot_dimension_numbers<[1], [0], [0], [1], [0, 0, 1, 1], [], []>} : vector<128x8xbf16>, vector<8x256xbf16>, vector<128x256xf32> -> vector<128x256xf32>
    %c0_3 = arith.constant 0 : index
    %c0_4 = arith.constant 0 : index
    %3 = vector.load %arg3[%c0_3, %c0_4] : memref<1x256xf32, #tpu.memory_space<vmem>>, vector<1x256xf32>
    %4 = vector.broadcast %3 : vector<1x256xf32> to vector<128x256xf32>
    %5 = arith.addf %2, %4 : vector<128x256xf32>
    %cst_5 = arith.constant 0.000000e+00 : f32
    %6 = vector.broadcast %cst_5 : f32 to vector<128x256xf32>
    %7 = arith.maximumf %5, %6 : vector<128x256xf32>
    %8 = arith.truncf %7 : vector<128x256xf32> to vector<128x256xbf16>
    %c0_6 = arith.constant 0 : index
    %c0_7 = arith.constant 0 : index
    %9 = vector.load %arg4[%c0_6, %c0_7] : memref<256x128xbf16, #tpu.memory_space<vmem>>, vector<256x128xbf16>
    %cst_8 = arith.constant dense<0.000000e+00> : vector<128x128xf32>
    %10 = tpu.matmul %8, %9, %cst_8 {dimension_numbers = #tpu.dot_dimension_numbers<[1], [0], [0], [1], [0, 0, 1, 1], [], []>} : vector<128x256xbf16>, vector<256x128xbf16>, vector<128x128xf32> -> vector<128x128xf32>
    %c0_9 = arith.constant 0 : index
    %c0_10 = arith.constant 0 : index
    %11 = vector.load %arg5[%c0_9, %c0_10] : memref<1x128xf32, #tpu.memory_space<vmem>>, vector<1x128xf32>
    %12 = vector.broadcast %11 : vector<1x128xf32> to vector<128x128xf32>
    %13 = arith.addf %10, %12 : vector<128x128xf32>
    %cst_11 = arith.constant 0.000000e+00 : f32
    %14 = vector.broadcast %cst_11 : f32 to vector<128x128xf32>
    %15 = arith.maximumf %13, %14 : vector<128x128xf32>
    %16 = arith.truncf %15 : vector<128x128xf32> to vector<128x128xbf16>
    %c0_12 = arith.constant 0 : index
    %c0_13 = arith.constant 0 : index
    %17 = vector.load %arg6[%c0_12, %c0_13] : memref<128x128xbf16, #tpu.memory_space<vmem>>, vector<128x128xbf16>
    %cst_14 = arith.constant dense<0.000000e+00> : vector<128x128xf32>
    %18 = tpu.matmul %16, %17, %cst_14 {dimension_numbers = #tpu.dot_dimension_numbers<[1], [0], [0], [1], [0, 0, 1, 1], [], []>} : vector<128x128xbf16>, vector<128x128xbf16>, vector<128x128xf32> -> vector<128x128xf32>
    %c0_15 = arith.constant 0 : index
    %c0_16 = arith.constant 0 : index
    %19 = vector.load %arg7[%c0_15, %c0_16] : memref<1x128xf32, #tpu.memory_space<vmem>>, vector<1x128xf32>
    %20 = vector.broadcast %19 : vector<1x128xf32> to vector<128x128xf32>
    %21 = arith.addf %18, %20 : vector<128x128xf32>
    %c0_17 = arith.constant 0 : index
    %c0_18 = arith.constant 0 : index
    %22 = vector.load %arg8[%c0_17, %c0_18] : memref<128x128xf32, #tpu.memory_space<vmem>>, vector<128x128xf32>
    tpu.vector_store %arg8[%c0_17, %c0_18], %21 {strides = array<i32>} : memref<128x128xf32, #tpu.memory_space<vmem>>, vector<128x128xf32>,
    return
  }
  func.func @transform_0(%arg0: i32) -> (i32, i32) {
    %c0_i32 = arith.constant 0 : i32
    %c0_i32_0 = arith.constant 0 : i32
    return %arg0, %c0_i32 : i32, i32
  }
  func.func @transform_1(%arg0: i32) -> (i32, i32) {
    %c0_i32 = arith.constant 0 : i32
    %c0_i32_0 = arith.constant 0 : i32
    %c0_i32_1 = arith.constant 0 : i32
    return %c0_i32, %c0_i32_0 : i32, i32
  }
  func.func @transform_2(%arg0: i32) -> (i32, i32) {
    %c0_i32 = arith.constant 0 : i32
    %c0_i32_0 = arith.constant 0 : i32
    %c0_i32_1 = arith.constant 0 : i32
    return %c0_i32, %c0_i32_0 : i32, i32
  }
  func.func @transform_3(%arg0: i32) -> (i32, i32) {
    %c0_i32 = arith.constant 0 : i32
    %c0_i32_0 = arith.constant 0 : i32
    %c0_i32_1 = arith.constant 0 : i32
    return %c0_i32, %c0_i32_0 : i32, i32
  }
  func.func @transform_4(%arg0: i32) -> (i32, i32) {
    %c0_i32 = arith.constant 0 : i32
    %c0_i32_0 = arith.constant 0 : i32
    %c0_i32_1 = arith.constant 0 : i32
    return %c0_i32, %c0_i32_0 : i32, i32
  }
  func.func @transform_5(%arg0: i32) -> (i32, i32) {
    %c0_i32 = arith.constant 0 : i32
    %c0_i32_0 = arith.constant 0 : i32
    %c0_i32_1 = arith.constant 0 : i32
    return %c0_i32, %c0_i32_0 : i32, i32
  }
  func.func @transform_6(%arg0: i32) -> (i32, i32) {
    %c0_i32 = arith.constant 0 : i32
    %c0_i32_0 = arith.constant 0 : i32
    %c0_i32_1 = arith.constant 0 : i32
    return %c0_i32, %c0_i32_0 : i32, i32
  }
  func.func @transform_7(%arg0: i32) -> (i32, i32) {
    %c0_i32 = arith.constant 0 : i32
    %c0_i32_0 = arith.constant 0 : i32
    return %arg0, %c0_i32 : i32, i32
  }
}

</mosaic_0001>

<llo_original>
// kernel: tpu_custom_call.1
$region0: #{tpu_custom_call.1}
  #allocation0 [shape = 'u32[]', space=smem, size = 0x4, offset = 0x4, fixed_abs, tag = 'smem constant byte address 0x4 - core index']
  #allocation1 [shape = 'u32[144,128]{1,0:T(1,128)}', space=vmem, size = 0x12000, scoped, tag = 'internal scratch']
  %s0 = inlined_call_operand.vmem [shape: bf16[256,8], index: 0, kind: input, shape index: {}]
  %s1 = inlined_call_operand.vmem [shape: bf16[8,256], index: 1, kind: input, shape index: {}]
  %s2 = inlined_call_operand.vmem [shape: f32[1,256], index: 2, kind: input, shape index: {}]
  %s3 = inlined_call_operand.vmem [shape: bf16[256,128], index: 3, kind: input, shape index: {}]
  %s4 = inlined_call_operand.vmem [shape: f32[1,128], index: 4, kind: input, shape index: {}]
  %s5 = inlined_call_operand.hbm [shape: bf16[128,128], index: 5, kind: input, shape index: {}]
  %s6 = inlined_call_operand.vmem [shape: f32[1,128], index: 6, kind: input, shape index: {}]
  %s7 = inlined_call_operand.hbm [shape: f32[256,128], index: 7, kind: output, shape index: {}]
  %s8 = sld [smem:[#allocation0]]
  $region65: #{tpu_custom_call.1} parent=0
    _
  %s10 = ssub.s32 1, %s8
  %s11 = scalar_select 0, %s10, %s8
  $region1: #{tpu_custom_call.1} parent=0
    #allocation2 [shape = 'u8[32768]{0}', space=vmem, size = 0x8000, scoped, tag = 'input window, operand 5, single buffered']
    #allocation3 [shape = 's32[2]{0}', space=sflag, size = 0x8, scoped, tag = 'scoped memory for tpu_custom_call.1']
    #allocation4 [shape = 's32[2]{0}', space=sflag, size = 0x8, scoped, tag = 'scoped memory for tpu_custom_call.1']
    #allocation5 [shape = 'u8[131072]{0}', space=vmem, size = 0x20000, scoped, tag = 'output window, operand 0']
    %12 = vsyncpa [#allocation3], 0
    %13 = vsyncpa [#allocation4], 0
    %s14 = scalar_lea.sflag [#allocation4], 1
    %15 = vsyncpa %s14, 0
    loop: start=0, step=1, limit=4
    $region2: #{tpu_custom_call.1} parent=1 // loop_pre_header
      _
    $region3: #{tpu_custom_call.1} parent=1 // loop_header
      %s17 = sphi 0, %s21
      %p18 = scmp.ge.s32.totalorder %s17, 4
      %s27 = sphi 0, %s29
      %s30 = sphi 0, %s27
      %s31 = sphi 0, %s30
      %s47 = sphi 0, %s31
      %s51 = sphi 0, %s51
      %s53 = sphi 0, %s51
      %s54 = sphi 0, %s53
      %s68 = sphi 0, %s54
      %s72 = sphi 0, %s72
      %s74 = sphi 0, %s72
      %s75 = sphi 0, %s74
      %s89 = sphi 0, %s75
      %s93 = sphi 0, %s93
      %s95 = sphi 0, %s93
      %s96 = sphi 0, %s95
      %s110 = sphi 0, %s96
      %s114 = sphi 0, %s114
      %s116 = sphi 0, %s114
      %s117 = sphi 0, %s116
      %s131 = sphi 0, %s117
      %s135 = sphi 0, %s135
      %s137 = sphi 0, %s135
      %s138 = sphi 0, %s137
      %s152 = sphi 0, %s138
      %s156 = sphi 0, %s156
      %s158 = sphi 0, %s156
      %s159 = sphi 0, %s158
      %s173 = sphi 0, %s159
      %s179 = sphi 0, %s181
      %s182 = sphi 0, %s179
      %s183 = sphi 0, %s182
      %s199 = sphi 0, %s183
    $region4: #{tpu_custom_call.1} parent=1 // loop_header_branch
      %20 = sbr.rel (%p18) target = $region8
    $region5: #{tpu_custom_call.1} parent=1 // loop_body
      %s22 = ssub.s32 %s17, 1
      %s23 = ssub.s32 %s17, 2
      %s24 = sadd.s32 %s17, 1
      %s25 = ssub.s32 %s17, %s24
      %p26 = scmp.eq.s32.totalorder %s25, 0
      %s28 = sadd.s32 %s27, 1
      %s29 = scalar_select %p26, %s27, %s28
      %p32 = pneg %p26
      %p33 = scmp.eq.s32.totalorder %s17, 1
      %p34 = por %p32, %p33
      %p35 = scmp.ne.s32.totalorder %s27, %s30
      %p36 = scmp.eq.s32.totalorder %s17, 0
      %p37 = por %p35, %p36
      %p38 = scmp.ne.s32.totalorder %s27, %s30
      %p39 = scmp.eq.s32.totalorder %s22, 1
      %p40 = por %p38, %p39
      %p41 = scmp.ne.s32.totalorder %s30, %s31
      %p42 = scmp.eq.s32.totalorder %s22, 0
      %p43 = por %p41, %p42
      %p44 = scmp.ne.s32.totalorder %s30, %s31
      %p45 = scmp.eq.s32.totalorder %s23, 1
      %p46 = por %p44, %p45
      %p48 = scmp.ne.s32.totalorder %s31, %s47
      %p49 = scmp.eq.s32.totalorder %s23, 0
      %p50 = por %p48, %p49
      %s52 = sadd.s32 %s51, 1
      %p55 = scmp.eq.s32.totalorder %s17, 1
      %p56 = scmp.ne.s32.totalorder %s51, %s53
      %p57 = scmp.eq.s32.totalorder %s17, 0
      %p58 = por %p56, %p57
      %p59 = scmp.ne.s32.totalorder %s51, %s53
      %p60 = scmp.eq.s32.totalorder %s22, 1
      %p61 = por %p59, %p60
      %p62 = scmp.ne.s32.totalorder %s53, %s54
      %p63 = scmp.eq.s32.totalorder %s22, 0
      %p64 = por %p62, %p63
      %p65 = scmp.ne.s32.totalorder %s53, %s54
      %p66 = scmp.eq.s32.totalorder %s23, 1
      %p67 = por %p65, %p66
      %p69 = scmp.ne.s32.totalorder %s54, %s68
      %p70 = scmp.eq.s32.totalorder %s23, 0
      %p71 = por %p69, %p70
      %s73 = sadd.s32 %s72, 1
      %p76 = scmp.eq.s32.totalorder %s17, 1
      %p77 = scmp.ne.s32.totalorder %s72, %s74
      %p78 = scmp.eq.s32.totalorder %s17, 0
      %p79 = por %p77, %p78
      %p80 = scmp.ne.s32.totalorder %s72, %s74
      %p81 = scmp.eq.s32.totalorder %s22, 1
      %p82 = por %p80, %p81
      %p83 = scmp.ne.s32.totalorder %s74, %s75
      %p84 = scmp.eq.s32.totalorder %s22, 0
      %p85 = por %p83, %p84
      %p86 = scmp.ne.s32.totalorder %s74, %s75
      %p87 = scmp.eq.s32.totalorder %s23, 1
      %p88 = por %p86, %p87
      %p90 = scmp.ne.s32.totalorder %s75, %s89
      %p91 = scmp.eq.s32.totalorder %s23, 0
      %p92 = por %p90, %p91
      %s94 = sadd.s32 %s93, 1
      %p97 = scmp.eq.s32.totalorder %s17, 1
      %p98 = scmp.ne.s32.totalorder %s93, %s95
      %p99 = scmp.eq.s32.totalorder %s17, 0
      %p100 = por %p98, %p99
      %p101 = scmp.ne.s32.totalorder %s93, %s95
      %p102 = scmp.eq.s32.totalorder %s22, 1
      %p103 = por %p101, %p102
      %p104 = scmp.ne.s32.totalorder %s95, %s96
      %p105 = scmp.eq.s32.totalorder %s22, 0
      %p106 = por %p104, %p105
      %p107 = scmp.ne.s32.totalorder %s95, %s96
      %p108 = scmp.eq.s32.totalorder %s23, 1
      %p109 = por %p107, %p108
      %p111 = scmp.ne.s32.totalorder %s96, %s110
      %p112 = scmp.eq.s32.totalorder %s23, 0
      %p113 = por %p111, %p112
      %s115 = sadd.s32 %s114, 1
      %p118 = scmp.eq.s32.totalorder %s17, 1
      %p119 = scmp.ne.s32.totalorder %s114, %s116
      %p120 = scmp.eq.s32.totalorder %s17, 0
      %p121 = por %p119, %p120
      %p122 = scmp.ne.s32.totalorder %s114, %s116
      %p123 = scmp.eq.s32.totalorder %s22, 1
      %p124 = por %p122, %p123
      %p125 = scmp.ne.s32.totalorder %s116, %s117
      %p126 = scmp.eq.s32.totalorder %s22, 0
      %p127 = por %p125, %p126
      %p128 = scmp.ne.s32.totalorder %s116, %s117
      %p129 = scmp.eq.s32.totalorder %s23, 1
      %p130 = por %p128, %p129
      %p132 = scmp.ne.s32.totalorder %s117, %s131
      %p133 = scmp.eq.s32.totalorder %s23, 0
      %p134 = por %p132, %p133
      %s136 = sadd.s32 %s135, 1
      %p139 = scmp.eq.s32.totalorder %s17, 1
      %p140 = scmp.ne.s32.totalorder %s135, %s137
      %p141 = scmp.eq.s32.totalorder %s17, 0
      %p142 = por %p140, %p141
      %p143 = scmp.ne.s32.totalorder %s135, %s137
      %p144 = scmp.eq.s32.totalorder %s22, 1
      %p145 = por %p143, %p144
      %p146 = scmp.ne.s32.totalorder %s137, %s138
      %p147 = scmp.eq.s32.totalorder %s22, 0
      %p148 = por %p146, %p147
      %p149 = scmp.ne.s32.totalorder %s137, %s138
      %p150 = scmp.eq.s32.totalorder %s23, 1
      %p151 = por %p149, %p150
      %p153 = scmp.ne.s32.totalorder %s138, %s152
      %p154 = scmp.eq.s32.totalorder %s23, 0
      %p155 = por %p153, %p154
      %s157 = sadd.s32 %s156, 1
      %p160 = scmp.eq.s32.totalorder %s17, 1
      %p161 = scmp.ne.s32.totalorder %s156, %s158
      %p162 = scmp.eq.s32.totalorder %s17, 0
      %p163 = por %p161, %p162
      %p164 = scmp.ne.s32.totalorder %s156, %s158
      %p165 = scmp.eq.s32.totalorder %s22, 1
      %p166 = por %p164, %p165
      %p167 = scmp.ne.s32.totalorder %s158, %s159
      %p168 = scmp.eq.s32.totalorder %s22, 0
      %p169 = por %p167, %p168
      %p170 = scmp.ne.s32.totalorder %s158, %s159
      %p171 = scmp.eq.s32.totalorder %s23, 1
      %p172 = por %p170, %p171
      %p174 = scmp.ne.s32.totalorder %s159, %s173
      %p175 = scmp.eq.s32.totalorder %s23, 0
      %p176 = por %p174, %p175
      %s177 = ssub.s32 %s17, %s24
      %p178 = scmp.eq.s32.totalorder %s177, 0
      %s180 = sadd.s32 %s179, 1
      %s181 = scalar_select %p178, %s179, %s180
      %p184 = pneg %p178
      %p185 = scmp.eq.s32.totalorder %s17, 1
      %p186 = por %p184, %p185
      %p187 = scmp.ne.s32.totalorder %s179, %s182
      %p188 = scmp.eq.s32.totalorder %s17, 0
      %p189 = por %p187, %p188
      %p190 = scmp.ne.s32.totalorder %s179, %s182
      %p191 = scmp.eq.s32.totalorder %s22, 1
      %p192 = por %p190, %p191
      %p193 = scmp.ne.s32.totalorder %s182, %s183
      %p194 = scmp.eq.s32.totalorder %s22, 0
      %p195 = por %p193, %p194
      %p196 = scmp.ne.s32.totalorder %s182, %s183
      %p197 = scmp.eq.s32.totalorder %s23, 1
      %p198 = por %p196, %p197
      %p200 = scmp.ne.s32.totalorder %s183, %s199
      %p201 = scmp.eq.s32.totalorder %s23, 0
      %p202 = por %p200, %p201
      %p203 = scmp.le.s32.totalorder 1, %s17
      %p204 = scmp.lt.s32.totalorder %s17, 3
      %p205 = pnand %p203, %p204
      %p206 = pneg %p205
      // Predicated region
      $region9: #{tpu_custom_call.1} parent=5 // pred_check
        _
      $region10: #{tpu_custom_call.1} parent=5 // pred_check_branch
        %208 = sbr.rel (%p205) target = $region12
      $region11: #{tpu_custom_call.1} parent=5 // pred_region
        %s209 = ssub.s32 %s17, 1
        // Predicated region
        $region13: #{tpu_custom_call.1} parent=11 // pred_check
          %p210 = pneg %p64
        $region14: #{tpu_custom_call.1} parent=11 // pred_check_branch
          %212 = sbr.rel (%p210) target = $region16
        $region15: #{tpu_custom_call.1} parent=11 // pred_region
          _
        $region16: #{tpu_custom_call.1} parent=11 // pred_fallthru
          _
        // Predicated region
        $region17: #{tpu_custom_call.1} parent=11 // pred_check
          %p213 = pneg %p85
        $region18: #{tpu_custom_call.1} parent=11 // pred_check_branch
          %215 = sbr.rel (%p213) target = $region20
        $region19: #{tpu_custom_call.1} parent=11 // pred_region
          _
        $region20: #{tpu_custom_call.1} parent=11 // pred_fallthru
          _
        // Predicated region
        $region21: #{tpu_custom_call.1} parent=11 // pred_check
          %p216 = pneg %p106
        $region22: #{tpu_custom_call.1} parent=11 // pred_check_branch
          %218 = sbr.rel (%p216) target = $region24
        $region23: #{tpu_custom_call.1} parent=11 // pred_region
          _
        $region24: #{tpu_custom_call.1} parent=11 // pred_fallthru
          _
        // Predicated region
        $region25: #{tpu_custom_call.1} parent=11 // pred_check
          %p219 = pneg %p127
        $region26: #{tpu_custom_call.1} parent=11 // pred_check_branch
          %221 = sbr.rel (%p219) target = $region28
        $region27: #{tpu_custom_call.1} parent=11 // pred_region
          _
        $region28: #{tpu_custom_call.1} parent=11 // pred_fallthru
          _
        // Predicated region
        $region29: #{tpu_custom_call.1} parent=11 // pred_check
          %p222 = pneg %p148
        $region30: #{tpu_custom_call.1} parent=11 // pred_check_branch
          %224 = sbr.rel (%p222) target = $region32
        $region31: #{tpu_custom_call.1} parent=11 // pred_region
          %s226 = ssub.s32 1024, 1024
          %227 = vsyncadd [#allocation3], %s226
          %s228 = sshll.u32 [#allocation2], 4
          %s229 = int_to_ptr.vmem [resolvable:$true] %s228
          %234 = dma.hbm_to_vmem [thread:$0]  %s5, 1024, %s229, [#allocation3], 64, 64, 4
        $region32: #{tpu_custom_call.1} parent=11 // pred_fallthru
          _
        // Predicated region
        $region33: #{tpu_custom_call.1} parent=11 // pred_check
          %p235 = pneg %p169
        $region34: #{tpu_custom_call.1} parent=11 // pred_check_branch
          %237 = sbr.rel (%p235) target = $region36
        $region35: #{tpu_custom_call.1} parent=11 // pred_region
          _
        $region36: #{tpu_custom_call.1} parent=11 // pred_fallthru
          _
      $region12: #{tpu_custom_call.1} parent=5 // pred_fallthru
        _
      %p238 = scmp.lt.s32.totalorder %s17, 2
      // Predicated region
      $region37: #{tpu_custom_call.1} parent=5 // pred_check
        %p239 = pneg %p238
      $region38: #{tpu_custom_call.1} parent=5 // pred_check_branch
        %241 = sbr.rel (%p239) target = $region40
      $region39: #{tpu_custom_call.1} parent=5 // pred_region
        // Predicated region
        $region41: #{tpu_custom_call.1} parent=39 // pred_check
          %p242 = pneg %p37
        $region42: #{tpu_custom_call.1} parent=39 // pred_check_branch
          %244 = sbr.rel (%p242) target = $region44
        $region43: #{tpu_custom_call.1} parent=39 // pred_region
          %s245 = smul.u32 16, %s17
          %p246 = scmp.lt.s32.totalorder %s245, 31
          %s247 = scalar_select %p246, %s245, 31
          %s248 = smul.addr %s247, 4
          %s249 = scalar_lea.vmem %s0, %s248
          %s250 = smul.u32 16, %s17
        $region44: #{tpu_custom_call.1} parent=39 // pred_fallthru
          _
      $region40: #{tpu_custom_call.1} parent=5 // pred_fallthru
        _
      %p251 = scmp.le.s32.totalorder 1, %s17
      %p252 = scmp.lt.s32.totalorder %s17, 3
      %p253 = pnand %p251, %p252
      %p254 = pneg %p253
      // Predicated region
      $region45: #{tpu_custom_call.1} parent=5 // pred_check
        _
      $region46: #{tpu_custom_call.1} parent=5 // pred_check_branch
        %256 = sbr.rel (%p253) target = $region48
      $region47: #{tpu_custom_call.1} parent=5 // pred_region
        %s257 = ssub.s32 %s17, 1
        // Predicated region
        $region49: #{tpu_custom_call.1} parent=47 // pred_check
          %p258 = pneg %p148
        $region50: #{tpu_custom_call.1} parent=47 // pred_check_branch
          %260 = sbr.rel (%p258) target = $region52
        $region51: #{tpu_custom_call.1} parent=47 // pred_region
          %261 = dma.done [#allocation3], 1024
        $region52: #{tpu_custom_call.1} parent=47 // pred_fallthru
          _
        %s262 = smul.u32 16, %s22
        %p263 = scmp.lt.s32.totalorder %s262, 31
        %s264 = scalar_select %p263, %s262, 31
        %s265 = smul.addr %s264, 4
        %s266 = scalar_lea.vmem %s0, %s265
        %p267 = pneg %p43
        %p268 = pneg %p40
        %p269 = pneg %p64
        %p270 = pneg %p61
        %p271 = pneg %p85
        %p272 = pneg %p82
        %p273 = pneg %p106
        %p274 = pneg %p103
        %p275 = pneg %p127
        %p276 = pneg %p124
        %p277 = pneg %p148
        %p278 = pneg %p145
        %p279 = pneg %p169
        %p280 = pneg %p166
        %p281 = pneg %p195
        %p282 = pneg %p192
        %s283 = sand.u32 %s182, 1
        %s284 = scalar_lea.sflag [#allocation4], %s283
        %s285 = sand.u32 %s182, 1
        %s286 = smul.addr %s285, 128
        %s287 = scalar_lea.vmem [#allocation5], %s286
        %s288 = smul.u32 16, %s22
        %p289 = scmp.lt.s32.totalorder %s288, 31
        %s290 = scalar_select %p289, %s288, 31
        %s291 = smul.addr %s290, 4
        %s292 = scalar_lea.vmem %s0, %s291
        %s293 = smul.u32 16, %s22
        %s294 = smul.u32 16, %s22
        %v296 = vld [vmem:[%s292] sm:$0xf]
        %v297 = vld [vmem:[%s292 + $0x4] sm:$0xf]
        %v298 = vld [vmem:[%s292 + $0x8] sm:$0xf]
        %v299 = vld [vmem:[%s292 + $0xc] sm:$0xf]
        %v300 = vld [vmem:[%s292 + $0x10] sm:$0xf]
        %v301 = vld [vmem:[%s292 + $0x14] sm:$0xf]
        %v302 = vld [vmem:[%s292 + $0x18] sm:$0xf]
        %v303 = vld [vmem:[%s292 + $0x1c] sm:$0xf]
        %v304 = vld [vmem:[%s292 + $0x20] sm:$0xf]
        %v305 = vld [vmem:[%s292 + $0x24] sm:$0xf]
        %v306 = vld [vmem:[%s292 + $0x28] sm:$0xf]
        %v307 = vld [vmem:[%s292 + $0x2c] sm:$0xf]
        %v308 = vld [vmem:[%s292 + $0x30] sm:$0xf]
        %v309 = vld [vmem:[%s292 + $0x34] sm:$0xf]
        %v310 = vld [vmem:[%s292 + $0x38] sm:$0xf]
        %v311 = vld [vmem:[%s292 + $0x3c] sm:$0xf]
        %v312 = vld [vmem:[%s1] sm:$0xff]
        %v313 = vld [vmem:[%s2] sm:$0x3]
        %v315 = vlaneseq
        %v316 = vshrl.u32 %v315, 7
        %v317 = vsub.s32 0, %v316
        %v318 = vrot.slane %v313, %v317
        %v319 = vlaneseq
        %v320 = vshrl.u32 %v319, 7
        %v321 = vsub.s32 1, %v320
        %v322 = vrot.slane %v313, %v321
        %v341 = vunpack.c.l.b16 %v296
        %v342 = vunpack.c.l.b16 %v297
        %v343 = vunpack.c.l.b16 %v298
        %v344 = vunpack.c.l.b16 %v299
        %v345 = vunpack.c.l.b16 %v300
        %v346 = vunpack.c.l.b16 %v301
        %v347 = vunpack.c.l.b16 %v302
        %v348 = vunpack.c.l.b16 %v303
        %v349 = vunpack.c.l.b16 %v304
        %v350 = vunpack.c.l.b16 %v305
        %v351 = vunpack.c.l.b16 %v306
        %v352 = vunpack.c.l.b16 %v307
        %v353 = vunpack.c.l.b16 %v308
        %v354 = vunpack.c.l.b16 %v309
        %v355 = vunpack.c.l.b16 %v310
        %v356 = vunpack.c.l.b16 %v311
        %v357 = vpack.c.b16 %v342, %v341
        %v358 = vpack.c.b16 %v344, %v343
        %v359 = vpack.c.b16 %v346, %v345
        %v360 = vpack.c.b16 %v348, %v347
        %v361 = vpack.c.b16 %v350, %v349
        %v362 = vpack.c.b16 %v352, %v351
        %v363 = vpack.c.b16 %v354, %v353
        %v364 = vpack.c.b16 %v356, %v355
        %v366 = vunpack.c.l.b16 %v312
        %v367 = vunpack.c.h.b16 %v312
        %v368 = vpack.c.b16 %v366, %v366
        %v369 = vpack.c.b16 %v367, %v367
        %vm370 = vcmask 64512
        %v372 = vsel %vm370, %v357, 0
        %v375 = vsel %vm370, %v358, 0
        %v378 = vsel %vm370, %v359, 0
        %v381 = vsel %vm370, %v360, 0
        %v384 = vsel %vm370, %v361, 0
        %v387 = vsel %vm370, %v362, 0
        %v390 = vsel %vm370, %v363, 0
        %v393 = vsel %vm370, %v364, 0
        %vm395 = vcmask 1043456
        %v397 = vsel %vm395, %v368, 0
        %v400 = vsel %vm395, %v369, 0
        %402 = vmatprep.subr.bf16.mxu0 %v400
        %403 = vmatpush1.bf16.msra.mxu0 %v397
        %404 = vmatprep.subr.bf16.mxu0 0
        %405 = vmatpush1.bf16.msra.mxu0 0
        %406 = vmatprep.subr.bf16.mxu0 0
        %407 = vmatpush1.bf16.msra.mxu0 0
        %408 = vmatprep.subr.bf16.mxu0 0
        %409 = vmatpush1.bf16.msra.mxu0 0
        %410 = vmatprep.subr.bf16.mxu0 0
        %411 = vmatpush1.bf16.msra.mxu0 0
        %412 = vmatprep.subr.bf16.mxu0 0
        %413 = vmatpush1.bf16.msra.mxu0 0
        %414 = vmatprep.subr.bf16.mxu0 0
        %415 = vmatpush1.bf16.msra.mxu0 0
        %416 = vmatprep.subr.bf16.mxu0 0
        %417 = vmatpush1.bf16.msra.mxu0 0
        %418 = vmatprep.subr.bf16.mxu0 0
        %419 = vmatpush1.bf16.msra.mxu0 0
        %420 = vmatprep.subr.bf16.mxu0 0
        %421 = vmatpush1.bf16.msra.mxu0 0
        %422 = vmatprep.subr.bf16.mxu0 0
        %423 = vmatpush1.bf16.msra.mxu0 0
        %424 = vmatprep.subr.bf16.mxu0 0
        %425 = vmatpush1.bf16.msra.mxu0 0
        %426 = vmatprep.subr.bf16.mxu0 0
        %427 = vmatpush1.bf16.msra.mxu0 0
        %428 = vmatprep.subr.bf16.mxu0 0
        %429 = vmatpush1.bf16.msra.mxu0 0
        %430 = vmatprep.subr.bf16.mxu0 0
        %431 = vmatpush1.bf16.msra.mxu0 0
        %432 = vmatprep.subr.bf16.mxu0 0
        %433 = vmatpush1.bf16.msra.mxu0 0
        %434 = vmatprep.mubr.bf16.mxu0 0
        %435 = vmatmul.mubr.bf16.gmra.mrb[0].mxu0 %v372
        %v436 = vpop.f32.mrb[0].mxu0
        %v437 = vadd.f32 %v318, %v436
        %v438 = vpop.f32.mrb[0].mxu0
        %v439 = vadd.f32 %v322, %v438
        %v440 = vpop.f32.mrb[0].mxu0
        %v441 = vadd.f32 %v318, %v440
        %v442 = vpop.f32.mrb[0].mxu0
        %v443 = vadd.f32 %v322, %v442
        %444 = vmatprep.mubr.bf16.mxu0 0
        %445 = vmatmul.mubr.bf16.gmra.mrb[0].mxu0 %v375
        %v446 = vpop.f32.mrb[0].mxu0
        %v447 = vadd.f32 %v318, %v446
        %v448 = vpop.f32.mrb[0].mxu0
        %v449 = vadd.f32 %v322, %v448
        %v450 = vpop.f32.mrb[0].mxu0
        %v451 = vadd.f32 %v318, %v450
        %v452 = vpop.f32.mrb[0].mxu0
        %v453 = vadd.f32 %v322, %v452
        %454 = vmatprep.mubr.bf16.mxu0 0
        %455 = vmatmul.mubr.bf16.gmra.mrb[0].mxu0 %v378
        %v456 = vpop.f32.mrb[0].mxu0
        %v457 = vadd.f32 %v318, %v456
        %v458 = vpop.f32.mrb[0].mxu0
        %v459 = vadd.f32 %v322, %v458
        %v460 = vpop.f32.mrb[0].mxu0
        %v461 = vadd.f32 %v318, %v460
        %v462 = vpop.f32.mrb[0].mxu0
        %v463 = vadd.f32 %v322, %v462
        %464 = vmatprep.mubr.bf16.mxu0 0
        %465 = vmatmul.mubr.bf16.gmra.mrb[0].mxu0 %v381
        %v466 = vpop.f32.mrb[0].mxu0
        %v467 = vadd.f32 %v318, %v466
        %v468 = vpop.f32.mrb[0].mxu0
        %v469 = vadd.f32 %v322, %v468
        %v470 = vpop.f32.mrb[0].mxu0
        %v471 = vadd.f32 %v318, %v470
        %v472 = vpop.f32.mrb[0].mxu0
        %v473 = vadd.f32 %v322, %v472
        %474 = vmatprep.mubr.bf16.mxu0 0
        %475 = vmatmul.mubr.bf16.gmra.mrb[0].mxu0 %v384
        %v476 = vpop.f32.mrb[0].mxu0
        %v477 = vadd.f32 %v318, %v476
        %v478 = vpop.f32.mrb[0].mxu0
        %v479 = vadd.f32 %v322, %v478
        %v480 = vpop.f32.mrb[0].mxu0
        %v481 = vadd.f32 %v318, %v480
        %v482 = vpop.f32.mrb[0].mxu0
        %v483 = vadd.f32 %v322, %v482
        %484 = vmatprep.mubr.bf16.mxu0 0
        %485 = vmatmul.mubr.bf16.gmra.mrb[0].mxu0 %v387
        %v486 = vpop.f32.mrb[0].mxu0
        %v487 = vadd.f32 %v318, %v486
        %v488 = vpop.f32.mrb[0].mxu0
        %v489 = vadd.f32 %v322, %v488
        %v490 = vpop.f32.mrb[0].mxu0
        %v491 = vadd.f32 %v318, %v490
        %v492 = vpop.f32.mrb[0].mxu0
        %v493 = vadd.f32 %v322, %v492
        %494 = vmatprep.mubr.bf16.mxu0 0
        %495 = vmatmul.mubr.bf16.gmra.mrb[0].mxu0 %v390
        %v496 = vpop.f32.mrb[0].mxu0
        %v497 = vadd.f32 %v318, %v496
        %v498 = vpop.f32.mrb[0].mxu0
        %v499 = vadd.f32 %v322, %v498
        %v500 = vpop.f32.mrb[0].mxu0
        %v501 = vadd.f32 %v318, %v500
        %v502 = vpop.f32.mrb[0].mxu0
        %v503 = vadd.f32 %v322, %v502
        %504 = vmatprep.mubr.bf16.mxu0 0
        %505 = vmatmul.mubr.bf16.gmra.mrb[0].mxu0 %v393
        %v506 = vpop.f32.mrb[0].mxu0
        %v507 = vadd.f32 %v318, %v506
        %v508 = vpop.f32.mrb[0].mxu0
        %v509 = vadd.f32 %v322, %v508
        %v510 = vpop.f32.mrb[0].mxu0
        %v511 = vadd.f32 %v318, %v510
        %v512 = vpop.f32.mrb[0].mxu0
        %v513 = vadd.f32 %v322, %v512
        %514 = vdwg.mxu0
        %v515 = vmax.f32 %v437, 0.0
        %v516 = vmax.f32 %v439, 0.0
        %v517 = vmax.f32 %v441, 0.0
        %v518 = vmax.f32 %v443, 0.0
        %v519 = vmax.f32 %v447, 0.0
        %v520 = vmax.f32 %v449, 0.0
        %v521 = vmax.f32 %v451, 0.0
        %v522 = vmax.f32 %v453, 0.0
        %v523 = vmax.f32 %v457, 0.0
        %v524 = vmax.f32 %v459, 0.0
        %v525 = vmax.f32 %v461, 0.0
        %v526 = vmax.f32 %v463, 0.0
        %v527 = vmax.f32 %v467, 0.0
        %v528 = vmax.f32 %v469, 0.0
        %v529 = vmax.f32 %v471, 0.0
        %v530 = vmax.f32 %v473, 0.0
        %v531 = vmax.f32 %v477, 0.0
        %v532 = vmax.f32 %v479, 0.0
        %v533 = vmax.f32 %v481, 0.0
        %v534 = vmax.f32 %v483, 0.0
        %v535 = vmax.f32 %v487, 0.0
        %v536 = vmax.f32 %v489, 0.0
        %v537 = vmax.f32 %v491, 0.0
        %v538 = vmax.f32 %v493, 0.0
        %v539 = vmax.f32 %v497, 0.0
        %v540 = vmax.f32 %v499, 0.0
        %v541 = vmax.f32 %v501, 0.0
        %v542 = vmax.f32 %v503, 0.0
        %v543 = vmax.f32 %v507, 0.0
        %v544 = vmax.f32 %v509, 0.0
        %v545 = vmax.f32 %v511, 0.0
        %v546 = vmax.f32 %v513, 0.0
        %v547 = vpack.c.bf16 %v517, %v515
        %v548 = vpack.c.bf16 %v518, %v516
        %v549 = vpack.c.bf16 %v521, %v519
        %v550 = vpack.c.bf16 %v522, %v520
        %v551 = vpack.c.bf16 %v525, %v523
        %v552 = vpack.c.bf16 %v526, %v524
        %v553 = vpack.c.bf16 %v529, %v527
        %v554 = vpack.c.bf16 %v530, %v528
        %v555 = vpack.c.bf16 %v533, %v531
        %v556 = vpack.c.bf16 %v534, %v532
        %v557 = vpack.c.bf16 %v537, %v535
        %v558 = vpack.c.bf16 %v538, %v536
        %v559 = vpack.c.bf16 %v541, %v539
        %v560 = vpack.c.bf16 %v542, %v540
        %v561 = vpack.c.bf16 %v545, %v543
        %v562 = vpack.c.bf16 %v546, %v544
        %v563 = vld [vmem:[%s3] sm:$0xf]
        %v564 = vld [vmem:[%s3 + $0x4] sm:$0xf]
        %v565 = vld [vmem:[%s3 + $0x8] sm:$0xf]
        %v566 = vld [vmem:[%s3 + $0xc] sm:$0xf]
        %v567 = vld [vmem:[%s3 + $0x10] sm:$0xf]
        %v568 = vld [vmem:[%s3 + $0x14] sm:$0xf]
        %v569 = vld [vmem:[%s3 + $0x18] sm:$0xf]
        %v570 = vld [vmem:[%s3 + $0x1c] sm:$0xf]
        %v571 = vld [vmem:[%s3 + $0x20] sm:$0xf]
        %v572 = vld [vmem:[%s3 + $0x24] sm:$0xf]
        %v573 = vld [vmem:[%s3 + $0x28] sm:$0xf]
        %v574 = vld [vmem:[%s3 + $0x2c] sm:$0xf]
        %v575 = vld [vmem:[%s3 + $0x30] sm:$0xf]
        %v576 = vld [vmem:[%s3 + $0x34] sm:$0xf]
        %v577 = vld [vmem:[%s3 + $0x38] sm:$0xf]
        %v578 = vld [vmem:[%s3 + $0x3c] sm:$0xf]
        %v579 = vld [vmem:[%s3 + $0x40] sm:$0xf]
        %v580 = vld [vmem:[%s3 + $0x44] sm:$0xf]
        %v581 = vld [vmem:[%s3 + $0x48] sm:$0xf]
        %v582 = vld [vmem:[%s3 + $0x4c] sm:$0xf]
        %v583 = vld [vmem:[%s3 + $0x50] sm:$0xf]
        %v584 = vld [vmem:[%s3 + $0x54] sm:$0xf]
        %v585 = vld [vmem:[%s3 + $0x58] sm:$0xf]
        %v586 = vld [vmem:[%s3 + $0x5c] sm:$0xf]
        %v587 = vld [vmem:[%s3 + $0x60] sm:$0xf]
        %v588 = vld [vmem:[%s3 + $0x64] sm:$0xf]
        %v589 = vld [vmem:[%s3 + $0x68] sm:$0xf]
        %v590 = vld [vmem:[%s3 + $0x6c] sm:$0xf]
        %v591 = vld [vmem:[%s3 + $0x70] sm:$0xf]
        %v592 = vld [vmem:[%s3 + $0x74] sm:$0xf]
        %v593 = vld [vmem:[%s3 + $0x78] sm:$0xf]
        %v594 = vld [vmem:[%s3 + $0x7c] sm:$0xf]
        %v595 = vld [vmem:[%s4] sm:$0x1]
        %v597 = vlaneseq
        %v598 = vshrl.u32 %v597, 7
        %v599 = vsub.s32 0, %v598
        %v600 = vrot.slane %v595, %v599
        %v634 = vunpack.c.l.b16 %v563
        %v635 = vunpack.c.l.b16 %v564
        %v636 = vunpack.c.l.b16 %v565
        %v637 = vunpack.c.l.b16 %v566
        %v638 = vunpack.c.l.b16 %v567
        %v639 = vunpack.c.l.b16 %v568
        %v640 = vunpack.c.l.b16 %v569
        %v641 = vunpack.c.l.b16 %v570
        %v642 = vunpack.c.l.b16 %v571
        %v643 = vunpack.c.l.b16 %v572
        %v644 = vunpack.c.l.b16 %v573
        %v645 = vunpack.c.l.b16 %v574
        %v646 = vunpack.c.l.b16 %v575
        %v647 = vunpack.c.l.b16 %v576
        %v648 = vunpack.c.l.b16 %v577
        %v649 = vunpack.c.l.b16 %v578
        %v650 = vunpack.c.l.b16 %v579
        %v651 = vunpack.c.l.b16 %v580
        %v652 = vunpack.c.l.b16 %v581
        %v653 = vunpack.c.l.b16 %v582
        %v654 = vunpack.c.l.b16 %v583
        %v655 = vunpack.c.l.b16 %v584
        %v656 = vunpack.c.l.b16 %v585
        %v657 = vunpack.c.l.b16 %v586
        %v658 = vunpack.c.l.b16 %v587
        %v659 = vunpack.c.l.b16 %v588
        %v660 = vunpack.c.l.b16 %v589
        %v661 = vunpack.c.l.b16 %v590
        %v662 = vunpack.c.l.b16 %v591
        %v663 = vunpack.c.l.b16 %v592
        %v664 = vunpack.c.l.b16 %v593
        %v665 = vunpack.c.l.b16 %v594
        %v666 = vpack.c.b16 %v635, %v634
        %v667 = vpack.c.b16 %v637, %v636
        %v668 = vpack.c.b16 %v639, %v638
        %v669 = vpack.c.b16 %v641, %v640
        %v670 = vpack.c.b16 %v643, %v642
        %v671 = vpack.c.b16 %v645, %v644
        %v672 = vpack.c.b16 %v647, %v646
        %v673 = vpack.c.b16 %v649, %v648
        %v674 = vpack.c.b16 %v651, %v650
        %v675 = vpack.c.b16 %v653, %v652
        %v676 = vpack.c.b16 %v655, %v654
        %v677 = vpack.c.b16 %v657, %v656
        %v678 = vpack.c.b16 %v659, %v658
        %v679 = vpack.c.b16 %v661, %v660
        %v680 = vpack.c.b16 %v663, %v662
        %v681 = vpack.c.b16 %v665, %v664
        %698 = vmatprep.subr.bf16.mxu0 0
        %699 = vmatpush1.bf16.msra.mxu0 %v666
        %700 = vmatprep.subr.bf16.mxu0 0
        %701 = vmatpush1.bf16.msra.mxu0 %v667
        %702 = vmatprep.subr.bf16.mxu0 0
        %703 = vmatpush1.bf16.msra.mxu0 %v668
        %704 = vmatprep.subr.bf16.mxu0 0
        %705 = vmatpush1.bf16.msra.mxu0 %v669
        %706 = vmatprep.subr.bf16.mxu0 0
        %707 = vmatpush1.bf16.msra.mxu0 %v670
        %708 = vmatprep.subr.bf16.mxu0 0
        %709 = vmatpush1.bf16.msra.mxu0 %v671
        %710 = vmatprep.subr.bf16.mxu0 0
        %711 = vmatpush1.bf16.msra.mxu0 %v672
        %712 = vmatprep.subr.bf16.mxu0 0
        %713 = vmatpush1.bf16.msra.mxu0 %v673
        %714 = vmatprep.subr.bf16.mxu0 0
        %715 = vmatpush1.bf16.msra.mxu0 %v674
        %716 = vmatprep.subr.bf16.mxu0 0
        %717 = vmatpush1.bf16.msra.mxu0 %v675
        %718 = vmatprep.subr.bf16.mxu0 0
        %719 = vmatpush1.bf16.msra.mxu0 %v676
        %720 = vmatprep.subr.bf16.mxu0 0
        %721 = vmatpush1.bf16.msra.mxu0 %v677
        %722 = vmatprep.subr.bf16.mxu0 0
        %723 = vmatpush1.bf16.msra.mxu0 %v678
        %724 = vmatprep.subr.bf16.mxu0 0
        %725 = vmatpush1.bf16.msra.mxu0 %v679
        %726 = vmatprep.subr.bf16.mxu0 0
        %727 = vmatpush1.bf16.msra.mxu0 %v680
        %728 = vmatprep.subr.bf16.mxu0 0
        %729 = vmatpush1.bf16.msra.mxu0 %v681
        %730 = vmatprep.mubr.bf16.mxu0 %v548
        %731 = vmatmul.mubr.bf16.gmra.mrb[0].mxu0 %v547
        %v732 = vpop.f32.mrb[0].mxu0
        %v733 = vadd.f32 %v600, %v732
        %v734 = vpop.f32.mrb[0].mxu0
        %v735 = vpop.f32.mrb[0].mxu0
        %v736 = vadd.f32 %v600, %v735
        %v737 = vpop.f32.mrb[0].mxu0
        %738 = vmatprep.mubr.bf16.mxu0 %v550
        %739 = vmatmul.mubr.bf16.gmra.mrb[0].mxu0 %v549
        %v740 = vpop.f32.mrb[0].mxu0
        %v741 = vadd.f32 %v600, %v740
        %v742 = vpop.f32.mrb[0].mxu0
        %v743 = vpop.f32.mrb[0].mxu0
        %v744 = vadd.f32 %v600, %v743
        %v745 = vpop.f32.mrb[0].mxu0
        %746 = vmatprep.mubr.bf16.mxu0 %v552
        %747 = vmatmul.mubr.bf16.gmra.mrb[0].mxu0 %v551
        %v748 = vpop.f32.mrb[0].mxu0
        %v749 = vadd.f32 %v600, %v748
        %v750 = vpop.f32.mrb[0].mxu0
        %v751 = vpop.f32.mrb[0].mxu0
        %v752 = vadd.f32 %v600, %v751
        %v753 = vpop.f32.mrb[0].mxu0
        %754 = vmatprep.mubr.bf16.mxu0 %v554
        %755 = vmatmul.mubr.bf16.gmra.mrb[0].mxu0 %v553
        %v756 = vpop.f32.mrb[0].mxu0
        %v757 = vadd.f32 %v600, %v756
        %v758 = vpop.f32.mrb[0].mxu0
        %v759 = vpop.f32.mrb[0].mxu0
        %v760 = vadd.f32 %v600, %v759
        %v761 = vpop.f32.mrb[0].mxu0
        %762 = vmatprep.mubr.bf16.mxu0 %v556
        %763 = vmatmul.mubr.bf16.gmra.mrb[0].mxu0 %v555
        %v764 = vpop.f32.mrb[0].mxu0
        %v765 = vadd.f32 %v600, %v764
        %v766 = vpop.f32.mrb[0].mxu0
        %v767 = vpop.f32.mrb[0].mxu0
        %v768 = vadd.f32 %v600, %v767
        %v769 = vpop.f32.mrb[0].mxu0
        %770 = vmatprep.mubr.bf16.mxu0 %v558
        %771 = vmatmul.mubr.bf16.gmra.mrb[0].mxu0 %v557
        %v772 = vpop.f32.mrb[0].mxu0
        %v773 = vadd.f32 %v600, %v772
        %v774 = vpop.f32.mrb[0].mxu0
        %v775 = vpop.f32.mrb[0].mxu0
        %v776 = vadd.f32 %v600, %v775
        %v777 = vpop.f32.mrb[0].mxu0
        %778 = vmatprep.mubr.bf16.mxu0 %v560
        %779 = vmatmul.mubr.bf16.gmra.mrb[0].mxu0 %v559
        %v780 = vpop.f32.mrb[0].mxu0
        %v781 = vadd.f32 %v600, %v780
        %v782 = vpop.f32.mrb[0].mxu0
        %v783 = vpop.f32.mrb[0].mxu0
        %v784 = vadd.f32 %v600, %v783
        %v785 = vpop.f32.mrb[0].mxu0
        %786 = vmatprep.mubr.bf16.mxu0 %v562
        %787 = vmatmul.mubr.bf16.gmra.mrb[0].mxu0 %v561
        %v788 = vpop.f32.mrb[0].mxu0
        %v789 = vadd.f32 %v600, %v788
        %v790 = vpop.f32.mrb[0].mxu0
        %v791 = vpop.f32.mrb[0].mxu0
        %v792 = vadd.f32 %v600, %v791
        %v793 = vpop.f32.mrb[0].mxu0
        %794 = vdwg.mxu0
        %v795 = vmax.f32 %v733, 0.0
        %v796 = vmax.f32 %v736, 0.0
        %v797 = vmax.f32 %v741, 0.0
        %v798 = vmax.f32 %v744, 0.0
        %v799 = vmax.f32 %v749, 0.0
        %v800 = vmax.f32 %v752, 0.0
        %v801 = vmax.f32 %v757, 0.0
        %v802 = vmax.f32 %v760, 0.0
        %v803 = vmax.f32 %v765, 0.0
        %v804 = vmax.f32 %v768, 0.0
        %v805 = vmax.f32 %v773, 0.0
        %v806 = vmax.f32 %v776, 0.0
        %v807 = vmax.f32 %v781, 0.0
        %v808 = vmax.f32 %v784, 0.0
        %v809 = vmax.f32 %v789, 0.0
        %v810 = vmax.f32 %v792, 0.0
        %v811 = vpack.c.bf16 %v796, %v795
        %v812 = vpack.c.bf16 %v798, %v797
        %v813 = vpack.c.bf16 %v800, %v799
        %v814 = vpack.c.bf16 %v802, %v801
        %v815 = vpack.c.bf16 %v804, %v803
        %v816 = vpack.c.bf16 %v806, %v805
        %v817 = vpack.c.bf16 %v808, %v807
        %v818 = vpack.c.bf16 %v810, %v809
        %v819 = vld [vmem:[#allocation2] sm:$0xf]
        %v820 = vld [vmem:[#allocation2 + $0x4] sm:$0xf]
        %v821 = vld [vmem:[#allocation2 + $0x8] sm:$0xf]
        %v822 = vld [vmem:[#allocation2 + $0xc] sm:$0xf]
        %v823 = vld [vmem:[#allocation2 + $0x10] sm:$0xf]
        %v824 = vld [vmem:[#allocation2 + $0x14] sm:$0xf]
        %v825 = vld [vmem:[#allocation2 + $0x18] sm:$0xf]
        %v826 = vld [vmem:[#allocation2 + $0x1c] sm:$0xf]
        %v827 = vld [vmem:[#allocation2 + $0x20] sm:$0xf]
        %v828 = vld [vmem:[#allocation2 + $0x24] sm:$0xf]
        %v829 = vld [vmem:[#allocation2 + $0x28] sm:$0xf]
        %v830 = vld [vmem:[#allocation2 + $0x2c] sm:$0xf]
        %v831 = vld [vmem:[#allocation2 + $0x30] sm:$0xf]
        %v832 = vld [vmem:[#allocation2 + $0x34] sm:$0xf]
        %v833 = vld [vmem:[#allocation2 + $0x38] sm:$0xf]
        %v834 = vld [vmem:[#allocation2 + $0x3c] sm:$0xf]
        %v835 = vld [vmem:[%s6] sm:$0x1]
        %v837 = vlaneseq
        %v838 = vshrl.u32 %v837, 7
        %v839 = vsub.s32 0, %v838
        %v840 = vrot.slane %v835, %v839
        %v858 = vunpack.c.l.b16 %v819
        %v859 = vunpack.c.l.b16 %v820
        %v860 = vunpack.c.l.b16 %v821
        %v861 = vunpack.c.l.b16 %v822
        %v862 = vunpack.c.l.b16 %v823
        %v863 = vunpack.c.l.b16 %v824
        %v864 = vunpack.c.l.b16 %v825
        %v865 = vunpack.c.l.b16 %v826
        %v866 = vunpack.c.l.b16 %v827
        %v867 = vunpack.c.l.b16 %v828
        %v868 = vunpack.c.l.b16 %v829
        %v869 = vunpack.c.l.b16 %v830
        %v870 = vunpack.c.l.b16 %v831
        %v871 = vunpack.c.l.b16 %v832
        %v872 = vunpack.c.l.b16 %v833
        %v873 = vunpack.c.l.b16 %v834
        %v874 = vpack.c.b16 %v859, %v858
        %v875 = vpack.c.b16 %v861, %v860
        %v876 = vpack.c.b16 %v863, %v862
        %v877 = vpack.c.b16 %v865, %v864
        %v878 = vpack.c.b16 %v867, %v866
        %v879 = vpack.c.b16 %v869, %v868
        %v880 = vpack.c.b16 %v871, %v870
        %v881 = vpack.c.b16 %v873, %v872
        %890 = vmatprep.subr.bf16.mxu0 0
        %891 = vmatpush1.bf16.msra.mxu0 %v874
        %892 = vmatprep.subr.bf16.mxu0 0
        %893 = vmatpush1.bf16.msra.mxu0 %v875
        %894 = vmatprep.subr.bf16.mxu0 0
        %895 = vmatpush1.bf16.msra.mxu0 %v876
        %896 = vmatprep.subr.bf16.mxu0 0
        %897 = vmatpush1.bf16.msra.mxu0 %v877
        %898 = vmatprep.subr.bf16.mxu0 0
        %899 = vmatpush1.bf16.msra.mxu0 %v878
        %900 = vmatprep.subr.bf16.mxu0 0
        %901 = vmatpush1.bf16.msra.mxu0 %v879
        %902 = vmatprep.subr.bf16.mxu0 0
        %903 = vmatpush1.bf16.msra.mxu0 %v880
        %904 = vmatprep.subr.bf16.mxu0 0
        %905 = vmatpush1.bf16.msra.mxu0 %v881
        %906 = vmatprep.subr.bf16.mxu0 0
        %907 = vmatpush1.bf16.msra.mxu0 0
        %908 = vmatprep.subr.bf16.mxu0 0
        %909 = vmatpush1.bf16.msra.mxu0 0
        %910 = vmatprep.subr.bf16.mxu0 0
        %911 = vmatpush1.bf16.msra.mxu0 0
        %912 = vmatprep.subr.bf16.mxu0 0
        %913 = vmatpush1.bf16.msra.mxu0 0
        %914 = vmatprep.subr.bf16.mxu0 0
        %915 = vmatpush1.bf16.msra.mxu0 0
        %916 = vmatprep.subr.bf16.mxu0 0
        %917 = vmatpush1.bf16.msra.mxu0 0
        %918 = vmatprep.subr.bf16.mxu0 0
        %919 = vmatpush1.bf16.msra.mxu0 0
        %920 = vmatprep.subr.bf16.mxu0 0
        %921 = vmatpush1.bf16.msra.mxu0 0
        %922 = vmatprep.mubr.bf16.mxu0 0
        %923 = vmatmul.mubr.bf16.gmra.mrb[0].mxu0 %v811
        %v924 = vpop.f32.mrb[0].mxu0
        %v925 = vadd.f32 %v840, %v924
        %v926 = vpop.f32.mrb[0].mxu0
        %v927 = vpop.f32.mrb[0].mxu0
        %v928 = vadd.f32 %v840, %v927
        %v929 = vpop.f32.mrb[0].mxu0
        %930 = vmatprep.mubr.bf16.mxu0 0
        %931 = vmatmul.mubr.bf16.gmra.mrb[0].mxu0 %v812
        %v932 = vpop.f32.mrb[0].mxu0
        %v933 = vadd.f32 %v840, %v932
        %v934 = vpop.f32.mrb[0].mxu0
        %v935 = vpop.f32.mrb[0].mxu0
        %v936 = vadd.f32 %v840, %v935
        %v937 = vpop.f32.mrb[0].mxu0
        %938 = vmatprep.mubr.bf16.mxu0 0
        %939 = vmatmul.mubr.bf16.gmra.mrb[0].mxu0 %v813
        %v940 = vpop.f32.mrb[0].mxu0
        %v941 = vadd.f32 %v840, %v940
        %v942 = vpop.f32.mrb[0].mxu0
        %v943 = vpop.f32.mrb[0].mxu0
        %v944 = vadd.f32 %v840, %v943
        %v945 = vpop.f32.mrb[0].mxu0
        %946 = vmatprep.mubr.bf16.mxu0 0
        %947 = vmatmul.mubr.bf16.gmra.mrb[0].mxu0 %v814
        %v948 = vpop.f32.mrb[0].mxu0
        %v949 = vadd.f32 %v840, %v948
        %v950 = vpop.f32.mrb[0].mxu0
        %v951 = vpop.f32.mrb[0].mxu0
        %v952 = vadd.f32 %v840, %v951
        %v953 = vpop.f32.mrb[0].mxu0
        %954 = vmatprep.mubr.bf16.mxu0 0
        %955 = vmatmul.mubr.bf16.gmra.mrb[0].mxu0 %v815
        %v956 = vpop.f32.mrb[0].mxu0
        %v957 = vadd.f32 %v840, %v956
        %v958 = vpop.f32.mrb[0].mxu0
        %v959 = vpop.f32.mrb[0].mxu0
        %v960 = vadd.f32 %v840, %v959
        %v961 = vpop.f32.mrb[0].mxu0
        %962 = vmatprep.mubr.bf16.mxu0 0
        %963 = vmatmul.mubr.bf16.gmra.mrb[0].mxu0 %v816
        %v964 = vpop.f32.mrb[0].mxu0
        %v965 = vadd.f32 %v840, %v964
        %v966 = vpop.f32.mrb[0].mxu0
        %v967 = vpop.f32.mrb[0].mxu0
        %v968 = vadd.f32 %v840, %v967
        %v969 = vpop.f32.mrb[0].mxu0
        %970 = vmatprep.mubr.bf16.mxu0 0
        %971 = vmatmul.mubr.bf16.gmra.mrb[0].mxu0 %v817
        %v972 = vpop.f32.mrb[0].mxu0
        %v973 = vadd.f32 %v840, %v972
        %v974 = vpop.f32.mrb[0].mxu0
        %v975 = vpop.f32.mrb[0].mxu0
        %v976 = vadd.f32 %v840, %v975
        %v977 = vpop.f32.mrb[0].mxu0
        %978 = vmatprep.mubr.bf16.mxu0 0
        %979 = vmatmul.mubr.bf16.gmra.mrb[0].mxu0 %v818
        %v980 = vpop.f32.mrb[0].mxu0
        %v981 = vadd.f32 %v840, %v980
        %v982 = vpop.f32.mrb[0].mxu0
        %v983 = vpop.f32.mrb[0].mxu0
        %v984 = vadd.f32 %v840, %v983
        %v985 = vpop.f32.mrb[0].mxu0
        %986 = vdwg.mxu0
        %987 = vst [vmem:[%s287] sm:$0xff] %v925
        %988 = vst [vmem:[%s287 + $0x8] sm:$0xff] %v928
        %989 = vst [vmem:[%s287 + $0x10] sm:$0xff] %v933
        %990 = vst [vmem:[%s287 + $0x18] sm:$0xff] %v936
        %991 = vst [vmem:[%s287 + $0x20] sm:$0xff] %v941
        %992 = vst [vmem:[%s287 + $0x28] sm:$0xff] %v944
        %993 = vst [vmem:[%s287 + $0x30] sm:$0xff] %v949
        %994 = vst [vmem:[%s287 + $0x38] sm:$0xff] %v952
        %995 = vst [vmem:[%s287 + $0x40] sm:$0xff] %v957
        %996 = vst [vmem:[%s287 + $0x48] sm:$0xff] %v960
        %997 = vst [vmem:[%s287 + $0x50] sm:$0xff] %v965
        %998 = vst [vmem:[%s287 + $0x58] sm:$0xff] %v968
        %999 = vst [vmem:[%s287 + $0x60] sm:$0xff] %v973
        %1000 = vst [vmem:[%s287 + $0x68] sm:$0xff] %v976
        %1001 = vst [vmem:[%s287 + $0x70] sm:$0xff] %v981
        %1002 = vst [vmem:[%s287 + $0x78] sm:$0xff] %v984
        %s1003 = sand.u32 %s182, 1
        %s1004 = scalar_lea.sflag [#allocation4], %s1003
        %s1005 = sand.u32 %s182, 1
        %s1006 = smul.addr %s1005, 128
        %s1007 = scalar_lea.vmem [#allocation5], %s1006
        // Predicated region
        $region53: #{tpu_custom_call.1} parent=47 // pred_check
          %p1008 = pneg %p192
        $region54: #{tpu_custom_call.1} parent=47 // pred_check_branch
          %1010 = sbr.rel (%p1008) target = $region56
        $region55: #{tpu_custom_call.1} parent=47 // pred_region
          %s1011 = smul.u32 16, %s22
          %s1013 = ssub.s32 2048, 2048
          %1014 = vsyncadd %s1004, %s1013
          %s1015 = smul.addr %s1011, 128
          %s1016 = scalar_lea.hbm %s7, %s1015
          %s1017 = sshll.u32 %s1007, 4
          %s1018 = int_to_ptr.vmem [resolvable:$true] %s1017
          %1023 = dma.vmem_to_hbm [thread:$0]  %s1018, 2048, %s1016, %s1004, 128, 128, 8
        $region56: #{tpu_custom_call.1} parent=47 // pred_fallthru
          _
      $region48: #{tpu_custom_call.1} parent=5 // pred_fallthru
        _
      %p1024 = scmp.le.s32.totalorder 2, %s17
      // Predicated region
      $region57: #{tpu_custom_call.1} parent=5 // pred_check
        %p1025 = pneg %p1024
      $region58: #{tpu_custom_call.1} parent=5 // pred_check_branch
        %1027 = sbr.rel (%p1025) target = $region60
      $region59: #{tpu_custom_call.1} parent=5 // pred_region
        %s1028 = ssub.s32 %s17, 2
        // Predicated region
        $region61: #{tpu_custom_call.1} parent=59 // pred_check
          %p1029 = pneg %p198
        $region62: #{tpu_custom_call.1} parent=59 // pred_check_branch
          %1031 = sbr.rel (%p1029) target = $region64
        $region63: #{tpu_custom_call.1} parent=59 // pred_region
          %s1032 = sand.u32 %s183, 1
          %s1033 = scalar_lea.sflag [#allocation4], %s1032
          %s1034 = sand.u32 %s183, 1
          %s1035 = smul.addr %s1034, 128
          %s1036 = scalar_lea.vmem [#allocation5], %s1035
          %1037 = dma.done %s1033, 2048
        $region64: #{tpu_custom_call.1} parent=59 // pred_fallthru
          _
      $region60: #{tpu_custom_call.1} parent=5 // pred_fallthru
        _
    $region6: #{tpu_custom_call.1} parent=1 // loop_footer
      %s21 = sadd.s32 1, %s17
    $region7: #{tpu_custom_call.1} parent=1 // loop_footer_branch
      %16 = sbr.rel target = $region3
    $region8: #{tpu_custom_call.1} parent=1 // loop_exit
      _
    %1038 = vsyncpa [#allocation3], 1
    %s1039 = scalar_lea.sflag [#allocation3], 1
    %1040 = vsyncpa %s1039, 1
    %1041 = vsyncpa [#allocation4], 1
    %s1042 = scalar_lea.sflag [#allocation4], 1
    %1043 = vsyncpa %s1042, 1

</llo_original>
